<compile_context>
chip_gen: v5e
topology: v5e:2x2
jax: 0.10.0
libtpu: 0.0.40
codegen_flags: <defaults>
</compile_context>

<pallas_src>
import functools

import jax
import jax.numpy as jnp
from jax.experimental import pallas as pl
from jax.experimental.pallas import tpu as pltpu


def _round_up(v, m):
    return (v + m - 1) // m * m


def _cdiv(a, b):
    return (a + b - 1) // b


def _vmem_cap_bytes():
    """Generation-aware VMEM budget: ~85% of physical per-core VMEM."""
    cap = 64 * 1024 * 1024  # conservative fallback (v7x per-TC physical)
    try:
        info = pltpu.get_tpu_info()
        cap = int(getattr(info, "vmem_capacity_bytes", cap))
    except Exception:
        pass
    return int(cap * 0.85)


# ----------------------------------------------------------------------------
# Kernels
# ----------------------------------------------------------------------------
def _resident_kernel(x_ref, *rest, n_linears, scaling_factor):
    """All layer weights VMEM-resident; grid tiles the batch axis only.

    rest = (w_0, b_0, w_1, b_1, ..., out_ref)
      x_ref/out_ref: (TB, Fp) f32 tiles streamed over the batch grid.
      w_i: (Fp, Fp) bf16 (pre-transposed to (in, out), constant index_map).
      b_i: (1, Fp) f32.
    """
    out_ref = rest[-1]
    params = rest[:-1]

    h = x_ref[...]
    for i in range(n_linears):
        w_ref = params[2 * i]
        b_ref = params[2 * i + 1]
        h = jnp.maximum(h, 0.0)                              # pre-activation (f32 VPU)
        h = jnp.dot(h.astype(jnp.bfloat16), w_ref[...],      # MXU, f32 accumulation
                    preferred_element_type=jnp.float32) + b_ref[...]
    # Re-read x for the residual instead of holding identity live across the chain.
    out_ref[...] = (x_ref[...] + jnp.float32(scaling_factor) * h).astype(out_ref.dtype)


def _streaming_kernel(x_ref, w_ref, b_ref, out_ref, h_ref, *, scaling_factor):
    """Fallback when weights cannot all stay resident: one layer per inner grid step.

      x_ref/out_ref: (TB, Fp) f32, constant across the layer axis (resident).
      w_ref: (1, Fp, Fp) bf16 slice of the stacked weights for layer l.
      b_ref: (1, 1, Fp) f32 slice of the stacked biases for layer l.
      h_ref: (TB, Fp) f32 VMEM scratch carrying activations across layer steps.
    """
    l = pl.program_id(1)

    @pl.when(l == 0)
    def _():
        h_ref[...] = x_ref[...]

    h = jnp.maximum(h_ref[...], 0.0)
    h = jnp.dot(h.astype(jnp.bfloat16), w_ref[0],
                preferred_element_type=jnp.float32) + b_ref[0]
    h_ref[...] = h

    @pl.when(l == pl.num_programs(1) - 1)
    def _():
        out_ref[...] = (x_ref[...] + jnp.float32(scaling_factor) * h).astype(out_ref.dtype)


# ----------------------------------------------------------------------------
# Parameter prep (call ONCE per parameter set; hoisted out of the hot path)
# ----------------------------------------------------------------------------
def prepare_params(weights, biases, *, weight_dtype=jnp.bfloat16):
    """weights[i]: (F, F) PyTorch (out, in) layout; biases[i]: (F,).

    Returns a tuple (w_0, b_0, w_1, b_1, ...) of padded, pre-transposed params:
      w_i: (Fp, Fp) weight_dtype in (in, out) layout; b_i: (1, Fp) f32.
    """
    F = weights[0].shape[0]
    Fp = _round_up(max(F, 128), 128)
    flat = []
    for w, b in zip(weights, biases):
        w_t = jnp.asarray(w, jnp.float32).T                       # (in, out): kernel does h @ W
        w_pad = jnp.zeros((Fp, Fp), weight_dtype).at[:F, :F].set(w_t.astype(weight_dtype))
        b_pad = jnp.zeros((1, Fp), jnp.float32).at[0, :F].set(jnp.asarray(b, jnp.float32))
        flat.append(w_pad)
        flat.append(b_pad)
    return tuple(flat)


# ----------------------------------------------------------------------------
# Forward
# ----------------------------------------------------------------------------
def preact_residual_block(x, flat_params, *, scaling_factor=1.0, force_stream=False):
    """x: (B, F) float32. flat_params: output of prepare_params(). Returns (B, F) f32."""
    B, F = x.shape
    n_linears = len(flat_params) // 2
    Fp = flat_params[0].shape[0]
    w_itemsize = jnp.dtype(flat_params[0].dtype).itemsize

    # ---- feature padding: only when F is not already lane-aligned -----------
    x_in = x.astype(jnp.float32)
    pad_features = (Fp != F)
    if pad_features:
        x_in = jnp.zeros((B, Fp), jnp.float32).at[:, :F].set(x_in)
    # Batch axis is never padded: grid = cdiv(B, TB); Pallas masks the partial
    # last tile (rows are independent so OOB rows are harmless and discarded).

    # ---- batch tile selection ------------------------------------------------
    if B >= 256:
        # >= 2 grid steps so v7x can shard the batch over both TensorCores, and
        # a multiple of 128 for clean MXU passes (v5e MXU is 4x128^2).
        TB = min(512, _round_up(_cdiv(B, 2), 128))
    else:
        TB = _round_up(B, 8)

    # ---- VMEM budget (counts Pallas double-buffering of every block) ---------
    cap = _vmem_cap_bytes()
    w_bytes = Fp * Fp * w_itemsize
    b_bytes = 8 * Fp * 4                                   # bias block padded to 8 sublanes
    resident_fixed = 2 * n_linears * (w_bytes + b_bytes)   # 2x: double-buffered blocks

    def io_bytes(tb):
        return 2 * 2 * tb * Fp * 4                         # x & out tiles, double-buffered

    use_resident = (not force_stream) and (resident_fixed + io_bytes(8) <= cap)

    if use_resident:
        while TB > 8 and resident_fixed + io_bytes(TB) > cap:
            TB = max(8, _round_up(TB // 2, 8))
        need = resident_fixed + io_bytes(TB)
    else:
        stream_fixed = 2 * (w_bytes + b_bytes)             # one layer, double-buffered

        def stream_need(tb):
            return stream_fixed + io_bytes(tb) + tb * Fp * 4   # + h scratch

        while TB > 8 and stream_need(TB) > cap:
            TB = max(8, _round_up(TB // 2, 8))
        need = stream_need(TB)

    vmem_limit = int(min(cap, max(need + (2 << 20), 32 << 20)))
    n_tiles = _cdiv(B, TB)
    out_shape = jax.ShapeDtypeStruct((B, Fp), jnp.float32)

    if use_resident:
        x_spec = pl.BlockSpec((TB, Fp), lambda i: (i, 0))
        # Constant index_map -> Pallas keeps weights/biases resident (no re-DMA);
        # VMEM budget above already counts their double buffers.
        w_spec = pl.BlockSpec((Fp, Fp), lambda i: (0, 0))
        b_spec = pl.BlockSpec((1, Fp), lambda i: (0, 0))
        param_specs = []
        for _ in range(n_linears):
            param_specs += [w_spec, b_spec]

        out = pl.pallas_call(
            functools.partial(_resident_kernel, n_linears=n_linears,
                              scaling_factor=scaling_factor),
            out_shape=out_shape,
            grid=(n_tiles,),
            in_specs=[x_spec] + param_specs,
            out_specs=pl.BlockSpec((TB, Fp), lambda i: (i, 0)),
            compiler_params=pltpu.CompilerParams(
                dimension_semantics=("parallel",),
                vmem_limit_bytes=vmem_limit),
        )(x_in, *flat_params)
    else:
        # Weight set too large for VMEM residency: stream one layer per inner
        # ("arbitrary") grid step; the next layer's weight DMA overlaps the
        # current layer's matmul via BlockSpec double-buffering.
        w_stack = jnp.stack(flat_params[0::2])              # (L, Fp, Fp)
        b_stack = jnp.stack(flat_params[1::2])              # (L, 1, Fp)

        out = pl.pallas_call(
            functools.partial(_streaming_kernel, scaling_factor=scaling_factor),
            out_shape=out_shape,
            grid=(n_tiles, n_linears),
            in_specs=[
                pl.BlockSpec((TB, Fp), lambda i, l: (i, 0)),
                pl.BlockSpec((1, Fp, Fp), lambda i, l: (l, 0, 0)),
                pl.BlockSpec((1, 1, Fp), lambda i, l: (l, 0, 0)),
            ],
            out_specs=pl.BlockSpec((TB, Fp), lambda i, l: (i, 0)),
            scratch_shapes=[pltpu.VMEM((TB, Fp), jnp.float32)],
            compiler_params=pltpu.CompilerParams(
                dimension_semantics=("parallel", "arbitrary"),
                vmem_limit_bytes=vmem_limit),
        )(x_in, w_stack, b_stack)

    if pad_features:
        out = out[:, :F]
    return out


# ----------------------------------------------------------------------------
# Reference + test
# ----------------------------------------------------------------------------
def _reference(x, weights, biases, scaling_factor):
    identity = x
    h = x
    for w, b in zip(weights, biases):
        h = jnp.maximum(h, 0.0)
        h = h @ w.T + b
    return identity + scaling_factor * h


if __name__ == "__main__":
    # Small shapes consistent with the module: n_features, n_linears, scaling_factor, use_bn=False
    B = 8            # batch
    F = 32           # n_features
    N_LINEARS = 2
    SCALING = 0.5

    key = jax.random.PRNGKey(0)
    k_x, *k_params = jax.random.split(key, 1 + 2 * N_LINEARS)

    x = jax.random.normal(k_x, (B, F), dtype=jnp.float32)

    # Deterministic PyTorch-style init: U(-1/sqrt(fan_in), 1/sqrt(fan_in))
    bound = 1.0 / (F ** 0.5)
    weights, biases = [], []
    for i in range(N_LINEARS):
        kw, kb = k_params[2 * i], k_params[2 * i + 1]
        weights.append(jax.random.uniform(kw, (F, F), jnp.float32, -bound, bound))
        biases.append(jax.random.uniform(kb, (F,), jnp.float32, -bound, bound))

    # Weight prep hoisted out of the per-call hot path (done once).
    flat_params = prepare_params(weights, biases)

    ref = _reference(x, weights, biases, SCALING)

    # Main (resident-weights) path.
    fwd = jax.jit(functools.partial(preact_residual_block, scaling_factor=SCALING))
    out = jax.block_until_ready(fwd(x, flat_params))
    assert out.shape == (B, F)
    # Tolerance loosened vs the pure-f32 reference: matmuls run on the MXU with
    # bf16 inputs (f32 accumulation).
    assert jnp.allclose(out, ref, atol=5e-2, rtol=5e-2), "resident path mismatch vs reference"

    # Also exercise the weight-streaming fallback path (one layer per grid step).
    fwd_stream = jax.jit(functools.partial(preact_residual_block,
                                           scaling_factor=SCALING, force_stream=True))
    out_s = jax.block_until_ready(fwd_stream(x, flat_params))
    assert out_s.shape == (B, F)
    assert jnp.allclose(out_s, ref, atol=5e-2, rtol=5e-2), "streaming path mismatch vs reference"

    print("KERNEL_OK")
</pallas_src>

<mosaic_0001>
module attributes {stable_mosaic.version = 11 : i64} {
  func.func @_resident_kernel(%arg0: i32, %arg1: memref<8x128xf32, #tpu.memory_space<vmem>>, %arg2: memref<128x128xbf16, #tpu.memory_space<vmem>>, %arg3: memref<1x128xf32, #tpu.memory_space<vmem>>, %arg4: memref<128x128xbf16, #tpu.memory_space<vmem>>, %arg5: memref<1x128xf32, #tpu.memory_space<vmem>>, %arg6: memref<8x128xf32, #tpu.memory_space<vmem>>) attributes {dimension_semantics = [#tpu.dimension_semantics<parallel>], iteration_bounds = array<i64: 1>, scalar_prefetch = 0 : i64, scratch_operands = 0 : i64, tpu.core_type = #tpu.core_type<tc>, window_params = [{transform_indices = @transform_0, window_bounds = array<i64: 8, 128>}, {pipeline_mode = #tpu.pipeline_mode<synchronous>, transform_indices = @transform_1, window_bounds = array<i64: 128, 128>}, {pipeline_mode = #tpu.pipeline_mode<synchronous>, transform_indices = @transform_2, window_bounds = array<i64: 1, 128>}, {pipeline_mode = #tpu.pipeline_mode<synchronous>, transform_indices = @transform_3, window_bounds = array<i64: 128, 128>}, {pipeline_mode = #tpu.pipeline_mode<synchronous>, transform_indices = @transform_4, window_bounds = array<i64: 1, 128>}, {transform_indices = @transform_5, window_bounds = array<i64: 8, 128>}]} {
    %c0 = arith.constant 0 : index
    %c0_0 = arith.constant 0 : index
    %0 = vector.load %arg1[%c0, %c0_0] : memref<8x128xf32, #tpu.memory_space<vmem>>, vector<8x128xf32>
    %cst = arith.constant 0.000000e+00 : f32
    %1 = vector.broadcast %cst : f32 to vector<8x128xf32>
    %2 = arith.maximumf %0, %1 : vector<8x128xf32>
    %3 = arith.truncf %2 : vector<8x128xf32> to vector<8x128xbf16>
    %c0_1 = arith.constant 0 : index
    %c0_2 = arith.constant 0 : index
    %4 = vector.load %arg2[%c0_1, %c0_2] : memref<128x128xbf16, #tpu.memory_space<vmem>>, vector<128x128xbf16>
    %cst_3 = arith.constant dense<0.000000e+00> : vector<8x128xf32>
    %5 = tpu.matmul %3, %4, %cst_3 {dimension_numbers = #tpu.dot_dimension_numbers<[1], [0], [0], [1], [0, 0, 1, 1], [], []>} : vector<8x128xbf16>, vector<128x128xbf16>, vector<8x128xf32> -> vector<8x128xf32>
    %c0_4 = arith.constant 0 : index
    %c0_5 = arith.constant 0 : index
    %6 = vector.load %arg3[%c0_4, %c0_5] : memref<1x128xf32, #tpu.memory_space<vmem>>, vector<1x128xf32>
    %7 = vector.broadcast %6 : vector<1x128xf32> to vector<8x128xf32>
    %8 = arith.addf %5, %7 : vector<8x128xf32>
    %cst_6 = arith.constant 0.000000e+00 : f32
    %9 = vector.broadcast %cst_6 : f32 to vector<8x128xf32>
    %10 = arith.maximumf %8, %9 : vector<8x128xf32>
    %11 = arith.truncf %10 : vector<8x128xf32> to vector<8x128xbf16>
    %c0_7 = arith.constant 0 : index
    %c0_8 = arith.constant 0 : index
    %12 = vector.load %arg4[%c0_7, %c0_8] : memref<128x128xbf16, #tpu.memory_space<vmem>>, vector<128x128xbf16>
    %cst_9 = arith.constant dense<0.000000e+00> : vector<8x128xf32>
    %13 = tpu.matmul %11, %12, %cst_9 {dimension_numbers = #tpu.dot_dimension_numbers<[1], [0], [0], [1], [0, 0, 1, 1], [], []>} : vector<8x128xbf16>, vector<128x128xbf16>, vector<8x128xf32> -> vector<8x128xf32>
    %c0_10 = arith.constant 0 : index
    %c0_11 = arith.constant 0 : index
    %14 = vector.load %arg5[%c0_10, %c0_11] : memref<1x128xf32, #tpu.memory_space<vmem>>, vector<1x128xf32>
    %15 = vector.broadcast %14 : vector<1x128xf32> to vector<8x128xf32>
    %16 = arith.addf %13, %15 : vector<8x128xf32>
    %c0_12 = arith.constant 0 : index
    %c0_13 = arith.constant 0 : index
    %17 = vector.load %arg1[%c0_12, %c0_13] : memref<8x128xf32, #tpu.memory_space<vmem>>, vector<8x128xf32>
    %cst_14 = arith.constant 5.000000e-01 : f32
    %18 = vector.broadcast %cst_14 : f32 to vector<8x128xf32>
    %19 = arith.mulf %18, %16 : vector<8x128xf32>
    %20 = arith.addf %17, %19 : vector<8x128xf32>
    %c0_15 = arith.constant 0 : index
    %c0_16 = arith.constant 0 : index
    %21 = vector.load %arg6[%c0_15, %c0_16] : memref<8x128xf32, #tpu.memory_space<vmem>>, vector<8x128xf32>
    tpu.vector_store %arg6[%c0_15, %c0_16], %20 {strides = array<i32>} : memref<8x128xf32, #tpu.memory_space<vmem>>, vector<8x128xf32>,
    return
  }
  func.func @transform_0(%arg0: i32) -> (i32, i32) {
    %c0_i32 = arith.constant 0 : i32
    %c0_i32_0 = arith.constant 0 : i32
    return %arg0, %c0_i32 : i32, i32
  }
  func.func @transform_1(%arg0: i32) -> (i32, i32) {
    %c0_i32 = arith.constant 0 : i32
    %c0_i32_0 = arith.constant 0 : i32
    %c0_i32_1 = arith.constant 0 : i32
    return %c0_i32, %c0_i32_0 : i32, i32
  }
  func.func @transform_2(%arg0: i32) -> (i32, i32) {
    %c0_i32 = arith.constant 0 : i32
    %c0_i32_0 = arith.constant 0 : i32
    %c0_i32_1 = arith.constant 0 : i32
    return %c0_i32, %c0_i32_0 : i32, i32
  }
  func.func @transform_3(%arg0: i32) -> (i32, i32) {
    %c0_i32 = arith.constant 0 : i32
    %c0_i32_0 = arith.constant 0 : i32
    %c0_i32_1 = arith.constant 0 : i32
    return %c0_i32, %c0_i32_0 : i32, i32
  }
  func.func @transform_4(%arg0: i32) -> (i32, i32) {
    %c0_i32 = arith.constant 0 : i32
    %c0_i32_0 = arith.constant 0 : i32
    %c0_i32_1 = arith.constant 0 : i32
    return %c0_i32, %c0_i32_0 : i32, i32
  }
  func.func @transform_5(%arg0: i32) -> (i32, i32) {
    %c0_i32 = arith.constant 0 : i32
    %c0_i32_0 = arith.constant 0 : i32
    return %arg0, %c0_i32 : i32, i32
  }
}

</mosaic_0001>

<llo_original>
// kernel: preact_residual_block.1
$region0: #{preact_residual_block.1}
  #allocation0 [shape = 'u32[]', space=smem, size = 0x4, offset = 0x4, fixed_abs, tag = 'smem constant byte address 0x4 - core index']
  #allocation1 [shape = 'u32[72,128]{1,0:T(1,128)}', space=vmem, size = 0x9000, scoped, tag = 'internal scratch']
  %s0 = inlined_call_operand.vmem [shape: f32[8,128], index: 0, kind: input, shape index: {}]
  %s1 = inlined_call_operand.hbm [shape: bf16[128,128], index: 1, kind: input, shape index: {}]
  %s2 = inlined_call_operand.vmem [shape: f32[1,128], index: 2, kind: input, shape index: {}]
  %s3 = inlined_call_operand.hbm [shape: bf16[128,128], index: 3, kind: input, shape index: {}]
  %s4 = inlined_call_operand.vmem [shape: f32[1,128], index: 4, kind: input, shape index: {}]
  %s5 = inlined_call_operand.hbm [shape: f32[8,128], index: 5, kind: output, shape index: {}]
  %s6 = sld [smem:[#allocation0]]
  $region38: #{preact_residual_block.1} parent=0
    _
  %s8 = ssub.s32 1, %s6
  %s9 = scalar_select 0, %s8, %s6
  $region1: #{preact_residual_block.1} parent=0
    #allocation2 [shape = 'u8[32768]{0}', space=vmem, size = 0x8000, scoped, tag = 'input window, operand 1, single buffered']
    #allocation3 [shape = 's32[1]{0}', space=sflag, size = 0x4, scoped, tag = 'scoped memory for preact_residual_block.1']
    #allocation4 [shape = 's32[1]{0}', space=sflag, size = 0x4, scoped, tag = 'scoped memory for preact_residual_block.1']
    #allocation5 [shape = 'u8[32768]{0}', space=vmem, size = 0x8000, scoped, tag = 'input window, operand 3, single buffered']
    #allocation6 [shape = 's32[1]{0}', space=sflag, size = 0x4, scoped, tag = 'scoped memory for preact_residual_block.1']
    #allocation7 [shape = 'u8[4096]{0}', space=vmem, size = 0x1000, scoped, tag = 'output window, operand 0, single buffered']
    %10 = vsyncpa [#allocation3], 0
    %11 = vsyncpa [#allocation6], 0
    %12 = vsyncpa [#allocation4], 0
    // Predicated region
    $region2: #{preact_residual_block.1} parent=1 // pred_check
      _
    $region3: #{preact_residual_block.1} parent=1 // pred_check_branch
      %14 = sbr.rel (0) target = $region5
    $region4: #{preact_residual_block.1} parent=1 // pred_region
      _
    $region5: #{preact_residual_block.1} parent=1 // pred_fallthru
      _
    // Predicated region
    $region6: #{preact_residual_block.1} parent=1 // pred_check
      _
    $region7: #{preact_residual_block.1} parent=1 // pred_check_branch
      %16 = sbr.rel (0) target = $region9
    $region8: #{preact_residual_block.1} parent=1 // pred_region
      %18 = vsyncadd [#allocation3], 0
      %s19 = sshll.u32 %s1, 4
      %s20 = int_to_ptr.hbm [resolvable:$true] %s19
      %s21 = sshll.u32 [#allocation2], 4
      %s22 = int_to_ptr.vmem [resolvable:$true] %s21
      %27 = dma.hbm_to_vmem [thread:$0]  %s20, 1024, %s22, [#allocation3], 64, 64, 4
    $region9: #{preact_residual_block.1} parent=1 // pred_fallthru
      _
    // Predicated region
    $region10: #{preact_residual_block.1} parent=1 // pred_check
      _
    $region11: #{preact_residual_block.1} parent=1 // pred_check_branch
      %29 = sbr.rel (0) target = $region13
    $region12: #{preact_residual_block.1} parent=1 // pred_region
      _
    $region13: #{preact_residual_block.1} parent=1 // pred_fallthru
      _
    // Predicated region
    $region14: #{preact_residual_block.1} parent=1 // pred_check
      _
    $region15: #{preact_residual_block.1} parent=1 // pred_check_branch
      %31 = sbr.rel (0) target = $region17
    $region16: #{preact_residual_block.1} parent=1 // pred_region
      %33 = vsyncadd [#allocation6], 0
      %s34 = sshll.u32 %s3, 4
      %s35 = int_to_ptr.hbm [resolvable:$true] %s34
      %s36 = sshll.u32 [#allocation5], 4
      %s37 = int_to_ptr.vmem [resolvable:$true] %s36
      %42 = dma.hbm_to_vmem [thread:$0]  %s35, 1024, %s37, [#allocation6], 64, 64, 4
    $region17: #{preact_residual_block.1} parent=1 // pred_fallthru
      _
    // Predicated region
    $region18: #{preact_residual_block.1} parent=1 // pred_check
      _
    $region19: #{preact_residual_block.1} parent=1 // pred_check_branch
      %44 = sbr.rel (0) target = $region21
    $region20: #{preact_residual_block.1} parent=1 // pred_region
      _
    $region21: #{preact_residual_block.1} parent=1 // pred_fallthru
      _
    // Predicated region
    $region22: #{preact_residual_block.1} parent=1 // pred_check
      _
    $region23: #{preact_residual_block.1} parent=1 // pred_check_branch
      %46 = sbr.rel (0) target = $region25
    $region24: #{preact_residual_block.1} parent=1 // pred_region
      %48 = dma.done [#allocation3], 1024
    $region25: #{preact_residual_block.1} parent=1 // pred_fallthru
      _
    // Predicated region
    $region26: #{preact_residual_block.1} parent=1 // pred_check
      _
    $region27: #{preact_residual_block.1} parent=1 // pred_check_branch
      %50 = sbr.rel (0) target = $region29
    $region28: #{preact_residual_block.1} parent=1 // pred_region
      %52 = dma.done [#allocation6], 1024
    $region29: #{preact_residual_block.1} parent=1 // pred_fallthru
      _
    %v53 = vld [vmem:[%s0] sm:$0xff]
    %v54 = vmax.f32 %v53, 0.0
    %v55 = vpack.c.bf16 %v54, %v54
    %v56 = vld [vmem:[#allocation2] sm:$0xf]
    %v57 = vld [vmem:[#allocation2 + $0x4] sm:$0xf]
    %v58 = vld [vmem:[#allocation2 + $0x8] sm:$0xf]
    %v59 = vld [vmem:[#allocation2 + $0xc] sm:$0xf]
    %v60 = vld [vmem:[#allocation2 + $0x10] sm:$0xf]
    %v61 = vld [vmem:[#allocation2 + $0x14] sm:$0xf]
    %v62 = vld [vmem:[#allocation2 + $0x18] sm:$0xf]
    %v63 = vld [vmem:[#allocation2 + $0x1c] sm:$0xf]
    %v64 = vld [vmem:[#allocation2 + $0x20] sm:$0xf]
    %v65 = vld [vmem:[#allocation2 + $0x24] sm:$0xf]
    %v66 = vld [vmem:[#allocation2 + $0x28] sm:$0xf]
    %v67 = vld [vmem:[#allocation2 + $0x2c] sm:$0xf]
    %v68 = vld [vmem:[#allocation2 + $0x30] sm:$0xf]
    %v69 = vld [vmem:[#allocation2 + $0x34] sm:$0xf]
    %v70 = vld [vmem:[#allocation2 + $0x38] sm:$0xf]
    %v71 = vld [vmem:[#allocation2 + $0x3c] sm:$0xf]
    %v72 = vld [vmem:[%s2] sm:$0x1]
    %v74 = vperm.slane %v72, 0
    %v92 = vunpack.c.l.b16 %v56
    %v93 = vunpack.c.l.b16 %v57
    %v94 = vunpack.c.l.b16 %v58
    %v95 = vunpack.c.l.b16 %v59
    %v96 = vunpack.c.l.b16 %v60
    %v97 = vunpack.c.l.b16 %v61
    %v98 = vunpack.c.l.b16 %v62
    %v99 = vunpack.c.l.b16 %v63
    %v100 = vunpack.c.l.b16 %v64
    %v101 = vunpack.c.l.b16 %v65
    %v102 = vunpack.c.l.b16 %v66
    %v103 = vunpack.c.l.b16 %v67
    %v104 = vunpack.c.l.b16 %v68
    %v105 = vunpack.c.l.b16 %v69
    %v106 = vunpack.c.l.b16 %v70
    %v107 = vunpack.c.l.b16 %v71
    %v108 = vpack.c.b16 %v93, %v92
    %v109 = vpack.c.b16 %v95, %v94
    %v110 = vpack.c.b16 %v97, %v96
    %v111 = vpack.c.b16 %v99, %v98
    %v112 = vpack.c.b16 %v101, %v100
    %v113 = vpack.c.b16 %v103, %v102
    %v114 = vpack.c.b16 %v105, %v104
    %v115 = vpack.c.b16 %v107, %v106
    %124 = vmatpush.bf16.msra.mxu0 %v115
    %125 = vmatpush.bf16.msra.mxu0 %v114
    %126 = vmatpush.bf16.msra.mxu0 %v113
    %127 = vmatpush.bf16.msra.mxu0 %v112
    %128 = vmatpush.bf16.msra.mxu0 %v111
    %129 = vmatpush.bf16.msra.mxu0 %v110
    %130 = vmatpush.bf16.msra.mxu0 %v109
    %131 = vmatpush.bf16.msra.mxu0 %v108
    %132 = vmatmul.bf16.gmra.mxu0 %v55
    %v133 = vpop.f32.mrf.mxu0
    %v134 = vadd.f32 %v74, %v133
    %v135 = vpop.f32.mrf.mxu0
    %136 = vdwg.mxu0
    %v137 = vmax.f32 %v134, 0.0
    %v138 = vpack.c.bf16 %v137, %v137
    %v139 = vld [vmem:[#allocation5] sm:$0xf]
    %v140 = vld [vmem:[#allocation5 + $0x4] sm:$0xf]
    %v141 = vld [vmem:[#allocation5 + $0x8] sm:$0xf]
    %v142 = vld [vmem:[#allocation5 + $0xc] sm:$0xf]
    %v143 = vld [vmem:[#allocation5 + $0x10] sm:$0xf]
    %v144 = vld [vmem:[#allocation5 + $0x14] sm:$0xf]
    %v145 = vld [vmem:[#allocation5 + $0x18] sm:$0xf]
    %v146 = vld [vmem:[#allocation5 + $0x1c] sm:$0xf]
    %v147 = vld [vmem:[#allocation5 + $0x20] sm:$0xf]
    %v148 = vld [vmem:[#allocation5 + $0x24] sm:$0xf]
    %v149 = vld [vmem:[#allocation5 + $0x28] sm:$0xf]
    %v150 = vld [vmem:[#allocation5 + $0x2c] sm:$0xf]
    %v151 = vld [vmem:[#allocation5 + $0x30] sm:$0xf]
    %v152 = vld [vmem:[#allocation5 + $0x34] sm:$0xf]
    %v153 = vld [vmem:[#allocation5 + $0x38] sm:$0xf]
    %v154 = vld [vmem:[#allocation5 + $0x3c] sm:$0xf]
    %v155 = vld [vmem:[%s4] sm:$0x1]
    %v157 = vperm.slane %v155, 0
    %v175 = vunpack.c.l.b16 %v139
    %v176 = vunpack.c.l.b16 %v140
    %v177 = vunpack.c.l.b16 %v141
    %v178 = vunpack.c.l.b16 %v142
    %v179 = vunpack.c.l.b16 %v143
    %v180 = vunpack.c.l.b16 %v144
    %v181 = vunpack.c.l.b16 %v145
    %v182 = vunpack.c.l.b16 %v146
    %v183 = vunpack.c.l.b16 %v147
    %v184 = vunpack.c.l.b16 %v148
    %v185 = vunpack.c.l.b16 %v149
    %v186 = vunpack.c.l.b16 %v150
    %v187 = vunpack.c.l.b16 %v151
    %v188 = vunpack.c.l.b16 %v152
    %v189 = vunpack.c.l.b16 %v153
    %v190 = vunpack.c.l.b16 %v154
    %v191 = vpack.c.b16 %v176, %v175
    %v192 = vpack.c.b16 %v178, %v177
    %v193 = vpack.c.b16 %v180, %v179
    %v194 = vpack.c.b16 %v182, %v181
    %v195 = vpack.c.b16 %v184, %v183
    %v196 = vpack.c.b16 %v186, %v185
    %v197 = vpack.c.b16 %v188, %v187
    %v198 = vpack.c.b16 %v190, %v189
    %207 = vmatpush.bf16.msra.mxu0 %v198
    %208 = vmatpush.bf16.msra.mxu0 %v197
    %209 = vmatpush.bf16.msra.mxu0 %v196
    %210 = vmatpush.bf16.msra.mxu0 %v195
    %211 = vmatpush.bf16.msra.mxu0 %v194
    %212 = vmatpush.bf16.msra.mxu0 %v193
    %213 = vmatpush.bf16.msra.mxu0 %v192
    %214 = vmatpush.bf16.msra.mxu0 %v191
    %215 = vmatmul.bf16.gmra.mxu0 %v138
    %v216 = vpop.f32.mrf.mxu0
    %v217 = vadd.f32 %v157, %v216
    %v218 = vpop.f32.mrf.mxu0
    %219 = vdwg.mxu0
    %v220 = vmul.f32 %v217, 0.5
    %v221 = vadd.f32 %v53, %v220
    %222 = vst [vmem:[#allocation7] sm:$0xff] %v221
    // Predicated region
    $region30: #{preact_residual_block.1} parent=1 // pred_check
      _
    $region31: #{preact_residual_block.1} parent=1 // pred_check_branch
      %224 = sbr.rel (0) target = $region33
    $region32: #{preact_residual_block.1} parent=1 // pred_region
      %226 = vsyncadd [#allocation4], 0
      %s228 = sshll.u32 [#allocation7], 4
      %s229 = int_to_ptr.vmem [resolvable:$true] %s228
      %s230 = sshll.u32 %s5, 4
      %s231 = int_to_ptr.hbm [resolvable:$true] %s230
      %233 = dma.vmem_to_hbm [thread:$0]  %s229, 128, %s231, [#allocation4]
    $region33: #{preact_residual_block.1} parent=1 // pred_fallthru
      _
    // Predicated region
    $region34: #{preact_residual_block.1} parent=1 // pred_check
      _
    $region35: #{preact_residual_block.1} parent=1 // pred_check_branch
      %235 = sbr.rel (0) target = $region37
    $region36: #{preact_residual_block.1} parent=1 // pred_region
      %237 = dma.done [#allocation4], 128
    $region37: #{preact_residual_block.1} parent=1 // pred_fallthru
      _
    %238 = vsyncpa [#allocation3], 1
    %239 = vsyncpa [#allocation6], 1
    %240 = vsyncpa [#allocation4], 1

</llo_original>
